<compile_context>
chip_gen: v6e
topology: v6e:2x2x1
jax: 0.10.0
libtpu: 0.0.40
codegen_flags: <defaults>
</compile_context>

<pallas_src>
import jax
import jax.numpy as jnp
from jax.experimental import pallas as pl
from jax.experimental.pallas import tpu as pltpu

MAX_LANES = 1024               # widest slab last-dim we will use (multiple of 128)
TARGET_BLOCK_BYTES = 2 << 20   # ~2 MiB f32 per plane block (near HBM roofline on all gens)
MIN_SPLIT_BYTES = 1 << 20      # slabs above this get >= 2 grid steps (v7x megacore)
VMEM_LIMIT_BYTES = 40 << 20    # 4 refs x 2 bufs x 2 MiB = 16 MiB pipeline, plus headroom


def _complex_relu_kernel(re_ref, im_ref, re_out_ref, im_out_ref):
    # Elementwise ReLU on both the real and imaginary float planes.
    re_out_ref[...] = jnp.maximum(re_ref[...], 0.0)
    im_out_ref[...] = jnp.maximum(im_ref[...], 0.0)


@jax.jit
def complex_relu(x: jax.Array) -> jax.Array:
    """relu(Re(x)) + 1j * relu(Im(x)), elementwise, for a complex64 array of any shape."""
    if x.dtype != jnp.complex64:
        # complex128 would need float64 planes, which Mosaic rejects / emulates slowly.
        raise TypeError(f"complex_relu expects complex64 input, got {x.dtype}")

    orig_shape = x.shape
    re = jnp.real(x)   # f32 plane; fuses into the pallas call via allow_input_fusion
    im = jnp.imag(x)
    plane_dtype = re.dtype
    elem_bytes = 4     # f32

    n = re.size
    # Widest power-of-two lane count (multiple of 128, <= MAX_LANES) dividing the flat
    # element count -> lane-dense layout, no padding needed in the common case.
    lanes = 128
    while lanes * 2 <= MAX_LANES and n % (lanes * 2) == 0:
        lanes *= 2
    pad = (-n) % lanes   # static; 0 for the demo shape

    def to_slab(a):
        flat = a.reshape(-1)
        if pad:
            # TODO(synk): for ragged sizes a Pallas boundary block would avoid this pad
            # pass entirely; under jit it at least fuses with the real/imag extraction.
            flat = jnp.pad(flat, (0, pad))
        return flat.reshape(-1, lanes)

    re_slab = to_slab(re)
    im_slab = to_slab(im)
    rows = (n + pad) // lanes
    plane_bytes = rows * lanes * elem_bytes

    if plane_bytes <= MIN_SPLIT_BYTES:
        # Small slab: one block covering everything (block_shape == array dims, so the
        # (8,128) divisibility constraint does not apply) -> exactly one pipeline step.
        block_rows = rows
    else:
        # Size the block by bytes so every grid step stays near the HBM roofline.
        block_rows = max(8, (TARGET_BLOCK_BYTES // (lanes * elem_bytes)) // 8 * 8)
        # Force >= 2 grid steps so the "parallel" axis can shard across v7x's two TCs.
        if block_rows >= rows:
            block_rows = max(8, (((rows + 1) // 2) + 7) // 8 * 8)
        block_rows = min(block_rows, rows)

    grid = (pl.cdiv(rows, block_rows),)
    blk = pl.BlockSpec((block_rows, lanes), lambda i: (i, 0))

    re_out, im_out = pl.pallas_call(
        _complex_relu_kernel,
        out_shape=(
            jax.ShapeDtypeStruct((rows, lanes), plane_dtype),
            jax.ShapeDtypeStruct((rows, lanes), plane_dtype),
        ),
        grid_spec=pltpu.PrefetchScalarGridSpec(
            num_scalar_prefetch=0,
            grid=grid,
            in_specs=[blk, blk],
            out_specs=(blk, blk),
        ),
        compiler_params=pltpu.CompilerParams(
            dimension_semantics=("parallel",),
            allow_input_fusion=[True, True],
            vmem_limit_bytes=VMEM_LIMIT_BYTES,
        ),
        cost_estimate=pl.CostEstimate(
            flops=2 * n, transcendentals=0, bytes_accessed=16 * n),
    )(re_slab, im_slab)

    def from_slab(s):
        flat = s.reshape(-1)
        if pad:
            flat = flat[:n]
        return flat.reshape(orig_shape)

    # TODO(synk): XLA BitcastConvert does not support complex dtypes, so the real/imag
    # split and this recombine cannot be replaced by a zero-copy bitcast.
    return jax.lax.complex(from_slab(re_out), from_slab(im_out))


if __name__ == "__main__":
    key = jax.random.PRNGKey(0)
    k_re, k_im = jax.random.split(key)
    shape = (2, 4, 16, 16)  # NCHW
    x_re = jax.random.normal(k_re, shape, dtype=jnp.float32)
    x_im = jax.random.normal(k_im, shape, dtype=jnp.float32)
    x = jax.lax.complex(x_re, x_im)  # complex64

    out = jax.block_until_ready(complex_relu(x))

    # Reference check in plain JAX: relu(Re) + 1j * relu(Im).
    ref = jax.lax.complex(jnp.maximum(x_re, 0.0), jnp.maximum(x_im, 0.0))
    assert out.shape == shape and out.dtype == jnp.complex64
    assert jnp.allclose(out, ref, atol=1e-6, rtol=1e-6)

    print("KERNEL_OK")
</pallas_src>

<mosaic_0001>
module attributes {stable_mosaic.version = 11 : i64} {
  func.func @_complex_relu_kernel(%arg0: i32, %arg1: memref<2x1024xf32, #tpu.memory_space<vmem>>, %arg2: memref<2x1024xf32, #tpu.memory_space<vmem>>, %arg3: memref<2x1024xf32, #tpu.memory_space<vmem>>, %arg4: memref<2x1024xf32, #tpu.memory_space<vmem>>) attributes {dimension_semantics = [#tpu.dimension_semantics<parallel>], iteration_bounds = array<i64: 1>, scalar_prefetch = 0 : i64, scratch_operands = 0 : i64, tpu.core_type = #tpu.core_type<tc>, window_params = [{transform_indices = @transform_0, window_bounds = array<i64: 2, 1024>}, {transform_indices = @transform_1, window_bounds = array<i64: 2, 1024>}, {transform_indices = @transform_2, window_bounds = array<i64: 2, 1024>}, {transform_indices = @transform_3, window_bounds = array<i64: 2, 1024>}]} {
    %c0 = arith.constant 0 : index
    %c0_0 = arith.constant 0 : index
    %0 = vector.load %arg1[%c0, %c0_0] : memref<2x1024xf32, #tpu.memory_space<vmem>>, vector<2x1024xf32>
    %cst = arith.constant 0.000000e+00 : f32
    %1 = vector.broadcast %cst : f32 to vector<2x1024xf32>
    %2 = arith.maximumf %0, %1 : vector<2x1024xf32>
    %c0_1 = arith.constant 0 : index
    %c0_2 = arith.constant 0 : index
    %3 = vector.load %arg3[%c0_1, %c0_2] : memref<2x1024xf32, #tpu.memory_space<vmem>>, vector<2x1024xf32>
    tpu.vector_store %arg3[%c0_1, %c0_2], %2 {strides = array<i32>} : memref<2x1024xf32, #tpu.memory_space<vmem>>, vector<2x1024xf32>,
    %c0_3 = arith.constant 0 : index
    %c0_4 = arith.constant 0 : index
    %4 = vector.load %arg2[%c0_3, %c0_4] : memref<2x1024xf32, #tpu.memory_space<vmem>>, vector<2x1024xf32>
    %cst_5 = arith.constant 0.000000e+00 : f32
    %5 = vector.broadcast %cst_5 : f32 to vector<2x1024xf32>
    %6 = arith.maximumf %4, %5 : vector<2x1024xf32>
    %c0_6 = arith.constant 0 : index
    %c0_7 = arith.constant 0 : index
    %7 = vector.load %arg4[%c0_6, %c0_7] : memref<2x1024xf32, #tpu.memory_space<vmem>>, vector<2x1024xf32>
    tpu.vector_store %arg4[%c0_6, %c0_7], %6 {strides = array<i32>} : memref<2x1024xf32, #tpu.memory_space<vmem>>, vector<2x1024xf32>,
    return
  }
  func.func @transform_0(%arg0: i32) -> (i32, i32) {
    %c0_i32 = arith.constant 0 : i32
    %c0_i32_0 = arith.constant 0 : i32
    return %arg0, %c0_i32 : i32, i32
  }
  func.func @transform_1(%arg0: i32) -> (i32, i32) {
    %c0_i32 = arith.constant 0 : i32
    %c0_i32_0 = arith.constant 0 : i32
    return %arg0, %c0_i32 : i32, i32
  }
  func.func @transform_2(%arg0: i32) -> (i32, i32) {
    %c0_i32 = arith.constant 0 : i32
    %c0_i32_0 = arith.constant 0 : i32
    return %arg0, %c0_i32 : i32, i32
  }
  func.func @transform_3(%arg0: i32) -> (i32, i32) {
    %c0_i32 = arith.constant 0 : i32
    %c0_i32_0 = arith.constant 0 : i32
    return %arg0, %c0_i32 : i32, i32
  }
}

</mosaic_0001>

<llo_original>
// kernel: custom-call.1
$region0: #{custom-call.1}
  %s0 = inlined_call_operand.hbm [shape: c64[2,4,16,16], index: 0, kind: input, shape index: {}]
  %s1 = inlined_call_operand.vmem [shape: f32[2,4,16,16], index: 1, kind: output, shape index: {}]
  %s2 = scalar_lea.hbm %s0, 2048
  $region1: #{custom-call.1} parent=0
    #allocation0 [shape = 's32[1]{0}', space=sflag, size = 0x4, scoped, tag = 'scoped memory for custom-call.1']
    %3 = vsyncpa [#allocation0], 0
    %s4 = sshll.u32 %s1, 4
    %s5 = int_to_ptr.vmem [resolvable:$true] %s4
    %7 = dma.hbm_to_vmem [thread:$0]  %s2, 2048, %s5, [#allocation0]
    %8 = dma.done [#allocation0], 2048
    %9 = vsyncpa [#allocation0], 1

// kernel: custom-call
$region0: #{custom-call}
  %s0 = inlined_call_operand.hbm [shape: c64[2,4,16,16], index: 0, kind: input, shape index: {}]
  %s1 = inlined_call_operand.vmem [shape: f32[2,4,16,16], index: 1, kind: output, shape index: {}]
  $region1: #{custom-call} parent=0
    #allocation0 [shape = 's32[1]{0}', space=sflag, size = 0x4, scoped, tag = 'scoped memory for custom-call']
    %2 = vsyncpa [#allocation0], 0
    %s3 = sshll.u32 %s1, 4
    %s4 = int_to_ptr.vmem [resolvable:$true] %s3
    %6 = dma.hbm_to_vmem [thread:$0]  %s0, 2048, %s4, [#allocation0]
    %7 = dma.done [#allocation0], 2048
    %8 = vsyncpa [#allocation0], 1

// kernel: custom-call.2
$region0: #{custom-call.2}
  %s0 = inlined_call_operand.vmem [shape: f32[2,4,16,16], index: 0, kind: input, shape index: {}]
  %s1 = inlined_call_operand.vmem [shape: f32[2,4,16,16], index: 1, kind: input, shape index: {}]
  %s2 = inlined_call_operand.hbm [shape: c64[2,4,16,16], index: 2, kind: output, shape index: {}]
  %s3 = scalar_lea.hbm %s2, 2048
  $region1: #{custom-call.2} parent=0
    #allocation0 [shape = 's32[1]{0}', space=sflag, size = 0x4, scoped, tag = 'scoped memory for custom-call.2']
    %4 = vsyncpa [#allocation0], 0
    %s5 = sshll.u32 %s0, 4
    %s6 = int_to_ptr.vmem [resolvable:$true] %s5
    %8 = dma.vmem_to_hbm [thread:$0]  %s6, 2048, %s2, [#allocation0]
    %9 = dma.done [#allocation0], 2048
    %10 = vsyncpa [#allocation0], 1
  $region2: #{custom-call.2} parent=0
    #allocation1 [shape = 's32[1]{0}', space=sflag, size = 0x4, scoped, tag = 'scoped memory for custom-call.2']
    %11 = vsyncpa [#allocation1], 0
    %s12 = sshll.u32 %s1, 4
    %s13 = int_to_ptr.vmem [resolvable:$true] %s12
    %15 = dma.vmem_to_hbm [thread:$0]  %s13, 2048, %s3, [#allocation1]
    %16 = dma.done [#allocation1], 2048
    %17 = vsyncpa [#allocation1], 1

// kernel: complex_relu.1
$region0: #{complex_relu.1}
  #allocation0 [shape = 'u32[]', space=smem, size = 0x4, offset = 0x4, fixed_abs, tag = 'smem constant byte address 0x4 - core index']
  #allocation1 [shape = 'u32[144,128]{1,0:T(1,128)}', space=vmem, size = 0x12000, scoped, tag = 'internal scratch']
  %s0 = inlined_call_operand.vmem [shape: f32[2,1024], index: 0, kind: input, shape index: {}]
  %s1 = inlined_call_operand.vmem [shape: f32[2,1024], index: 1, kind: input, shape index: {}]
  %s2 = inlined_call_operand.vmem [shape: f32[2,1024], index: 2, kind: output, shape index: {0}]
  %s3 = inlined_call_operand.vmem [shape: f32[2,1024], index: 3, kind: output, shape index: {1}]
  %4 = xla_tuple %s2, %s3
  %s5 = sld [smem:[#allocation0]]
  $region26: #{complex_relu.1} parent=0
    _
  %s7 = ssub.s32 1, %s5
  %s8 = scalar_select 0, %s7, %s5
  // Predicated region
  $region2: #{complex_relu.1} parent=0 // pred_check
    _
  $region3: #{complex_relu.1} parent=0 // pred_check_branch
    %10 = sbr.rel (0) target = $region5
  $region4: #{complex_relu.1} parent=0 // pred_region
    _
  $region5: #{complex_relu.1} parent=0 // pred_fallthru
    _
  // Predicated region
  $region6: #{complex_relu.1} parent=0 // pred_check
    _
  $region7: #{complex_relu.1} parent=0 // pred_check_branch
    %12 = sbr.rel (0) target = $region9
  $region8: #{complex_relu.1} parent=0 // pred_region
    _
  $region9: #{complex_relu.1} parent=0 // pred_fallthru
    _
  %v13 = vld [vmem:[%s0] sm:$0xff]
  %v14 = vld [vmem:[%s0 + $0x8] sm:$0xff]
  %v15 = vmax.f32 %v13, 0.0
  %v16 = vmax.f32 %v14, 0.0
  %17 = vst [vmem:[%s2] sm:$0xff] %v15
  %18 = vst [vmem:[%s2 + $0x8] sm:$0xff] %v16
  %v19 = vld [vmem:[%s1] sm:$0xff]
  %v20 = vld [vmem:[%s1 + $0x8] sm:$0xff]
  %v21 = vmax.f32 %v19, 0.0
  %v22 = vmax.f32 %v20, 0.0
  %23 = vst [vmem:[%s3] sm:$0xff] %v21
  %24 = vst [vmem:[%s3 + $0x8] sm:$0xff] %v22
  // Predicated region
  $region10: #{complex_relu.1} parent=0 // pred_check
    _
  $region11: #{complex_relu.1} parent=0 // pred_check_branch
    %26 = sbr.rel (0) target = $region13
  $region12: #{complex_relu.1} parent=0 // pred_region
    _
  $region13: #{complex_relu.1} parent=0 // pred_fallthru
    _
  // Predicated region
  $region14: #{complex_relu.1} parent=0 // pred_check
    _
  $region15: #{complex_relu.1} parent=0 // pred_check_branch
    %28 = sbr.rel (0) target = $region17
  $region16: #{complex_relu.1} parent=0 // pred_region
    _
  $region17: #{complex_relu.1} parent=0 // pred_fallthru
    _
  // Predicated region
  $region18: #{complex_relu.1} parent=0 // pred_check
    _
  $region19: #{complex_relu.1} parent=0 // pred_check_branch
    %30 = sbr.rel (0) target = $region21
  $region20: #{complex_relu.1} parent=0 // pred_region
    _
  $region21: #{complex_relu.1} parent=0 // pred_fallthru
    _
  // Predicated region
  $region22: #{complex_relu.1} parent=0 // pred_check
    _
  $region23: #{complex_relu.1} parent=0 // pred_check_branch
    %32 = sbr.rel (0) target = $region25
  $region24: #{complex_relu.1} parent=0 // pred_region
    _
  $region25: #{complex_relu.1} parent=0 // pred_fallthru
    _

</llo_original>
